<compile_context>
chip_gen: v7x
topology: tpu7x:2x2x1
jax: 0.10.0
libtpu: 0.0.40
codegen_flags: <defaults>
</compile_context>

<pallas_src>
import functools

import jax
import jax.numpy as jnp
from jax import lax
from jax.experimental import pallas as pl
from jax.experimental.pallas import tpu as pltpu


def _round_up(x: int, m: int) -> int:
    return pl.cdiv(x, m) * m


def _unichar_kernel(tok_ref, tbl_ref, out_ref, *, group):
    """One token block.

    tok_ref : [1, TR, G] int32    token ids; G consecutive tokens per output row
    tbl_ref : [Vtok, D]  f32/bf16 fused per-token embedding table
    out_ref : [TR, G*D]           lane-dense output tile (row-major == [G*TR, D])
    """
    vtok, d = tbl_ref.shape
    tok_all = tok_ref[0]                                         # [TR, G] int32
    tbl = tbl_ref[...]                                           # [Vtok, D]
    vocab_row = lax.broadcasted_iota(jnp.int32, (1, vtok), 1)    # [1, Vtok] (tiny)

    # Static unroll over the G group positions.  Each step: one-hot of the
    # tokens at group offset s, one MXU matmul, one static-lane-offset store
    # into the VMEM tile.  The HBM writeback of the whole tile remains a single
    # lane-dense (128-wide) DMA.  (On v5e the G narrow VMEM stores share the
    # single store slot, but they are tiny relative to the tile writeback.)
    for s in range(group):
        tok_col = tok_all[:, s:s + 1]                            # [TR, 1]
        onehot = (tok_col == vocab_row).astype(tbl.dtype)        # [TR, Vtok] exact 0/1
        sub = jnp.dot(onehot, tbl,
                      preferred_element_type=jnp.float32)        # [TR, D] f32 acc
        out_ref[:, s * d:(s + 1) * d] = sub.astype(out_ref.dtype)


def build_fused_token_table(tokens_chars_idx, char_weight):
    """One-time setup: fuse the char-index and char-embedding tables.

    fused_table[v, :] == char_weight[tokens_chars_idx[v]].reshape(-1)   # [Vtok, D]
    (row-major flatten == the torch .view(len(input), -1))
    """
    vtok, c = tokens_chars_idx.shape
    _, ec = char_weight.shape
    return char_weight[tokens_chars_idx].reshape(vtok, c * ec)


def unicode_characters_embedding(input_tokens, tokens_chars_idx, char_weight,
                                 *, tb=4096, mxu_dtype=None, out_dtype=None,
                                 fused_table=None):
    """input_tokens: [bsz, seq_len] int; returns [bsz, seq_len, embedding_dim]."""
    bsz, seq_len = input_tokens.shape
    n = bsz * seq_len
    vtok, c = tokens_chars_idx.shape
    _, ec = char_weight.shape
    d = c * ec                                    # == embedding_dim
    if out_dtype is None:
        out_dtype = char_weight.dtype             # bf16 here halves output HBM traffic

    if fused_table is None:
        fused_table = build_fused_token_table(tokens_chars_idx, char_weight)
    if mxu_dtype is not None:
        fused_table = fused_table.astype(mxu_dtype)   # opt-in bf16 MXU path

    # Group G consecutive tokens per output row so the output's last dim is
    # G*D = 128 (lane-dense tiles / unmasked stores).  Falls back to G=1 when
    # D is already >= 128 or does not divide 128.
    group = (128 // d) if (d < 128 and 128 % d == 0) else 1

    # Token-block sizing: multiple of 8*group (sublane rule for the [TB/G, *]
    # out tile), large default to amortize per-grid-step overhead, clamped to
    # the (rounded) problem size, and split in two when free so both v7x
    # TensorCores get work.
    quantum = 8 * group
    grain = 512 if 512 % quantum == 0 else quantum
    tb = _round_up(max(int(tb), grain), grain)
    tb = min(tb, _round_up(n, grain))
    n_pad = _round_up(n, tb)
    n_blocks = n_pad // tb
    if n_blocks == 1 and tb >= 2 * grain and (tb // 2) % grain == 0:
        tb //= 2
        n_blocks = n_pad // tb

    tile_rows = tb // group
    lane_d = group * d
    out_rows = n_pad // group

    flat = input_tokens.reshape(n).astype(jnp.int32)
    flat = jnp.pad(flat, (0, n_pad - n))              # pad ids = 0, sliced off below
    tok_blocks = flat.reshape(n_blocks, tile_rows, group)

    # VMEM budget (per TensorCore): single-buffered table + double-buffered
    # token / output tiles + one-hot temps.  32 MiB floor is inside every
    # generation's scoped ceiling; re-derive tb against 64 MiB/core on v7x
    # before requesting more.
    tbl_bytes = vtok * d * jnp.dtype(fused_table.dtype).itemsize
    out_bytes = 2 * tb * d * jnp.dtype(out_dtype).itemsize
    tmp_bytes = 2 * tile_rows * _round_up(vtok, 128) * 4
    tok_bytes = 2 * tb * 4
    vmem_limit = int(min(max(2 * (tbl_bytes + out_bytes + tmp_bytes + tok_bytes),
                             32 * 1024 * 1024),
                         64 * 1024 * 1024))

    out2d = pl.pallas_call(
        functools.partial(_unichar_kernel, group=group),
        out_shape=jax.ShapeDtypeStruct((out_rows, lane_d), out_dtype),
        grid=(n_blocks,),
        in_specs=[
            # token ids of this block (tiny: 4 B/token)
            pl.BlockSpec((1, tile_rows, group), lambda i: (i, 0, 0)),
            # fused table: constant block, single-buffered -> one VMEM copy
            pl.BlockSpec((vtok, d), lambda i: (0, 0),
                         pipeline_mode=pl.Buffered(1)),
        ],
        # lane-dense [TB/G, G*D] tile that is already row-major [N, D]
        out_specs=pl.BlockSpec((tile_rows, lane_d), lambda i: (i, 0)),
        compiler_params=pltpu.CompilerParams(
            dimension_semantics=("parallel",),        # megacore on v7x
            vmem_limit_bytes=vmem_limit),
    )(tok_blocks, fused_table)

    # Free row-major reshape back to [N, D]; drop the padded tail (identity
    # slice when n is a multiple of tb, i.e. no extra HBM pass in that case).
    out_flat = out2d.reshape(n_pad, d)[:n]
    return out_flat.reshape(bsz, seq_len, d)


if __name__ == "__main__":
    key = jax.random.PRNGKey(0)
    k_tci, k_w, k_tok1, k_tok2 = jax.random.split(key, 4)

    # Module-implied (small) shapes.
    embedding_dim = 32            # self.embedding_dim
    char_rand_emb_size = 8        # char_rand_embedding.weight.shape[1]
    C = embedding_dim // char_rand_emb_size      # char slots per token (= 4)
    vocab_size = 64               # len(vocab.symbols)
    num_chars = 30                # len(chars_in_vocab)
    char_table_rows = num_chars + 1              # indices offset by 1, row 0 = pad char

    # tokens_chars_idx: [vocab_size, C], first 5 rows zero (special tokens skipped).
    tci = jax.random.randint(k_tci, (vocab_size, C), 1, num_chars + 1, dtype=jnp.int32)
    tci = tci.at[:5, :].set(0)

    # char embedding table, row 0 zeroed (torch.nn.init.constant_(weight[0], 0)).
    char_weight = jax.random.normal(k_w, (char_table_rows, char_rand_emb_size), jnp.float32)
    char_weight = char_weight.at[0, :].set(0.0)

    # Case 1: [bsz=2, seq_len=8] — single block.
    bsz, seq_len = 2, 8
    toks = jax.random.randint(k_tok1, (bsz, seq_len), 0, vocab_size, dtype=jnp.int32)
    out = jax.block_until_ready(
        unicode_characters_embedding(toks, tci, char_weight))
    ref = char_weight[tci[toks.reshape(-1)]].reshape(bsz, seq_len, embedding_dim)
    assert out.shape == (bsz, seq_len, embedding_dim)
    assert jnp.allclose(out, ref, atol=1e-6), "mismatch vs reference (case 1)"

    # Case 2: multi-block grid with a padded tail (n=1200, tb=512 -> 3 blocks).
    bsz2, seq_len2 = 4, 300
    toks2 = jax.random.randint(k_tok2, (bsz2, seq_len2), 0, vocab_size, dtype=jnp.int32)
    out2 = jax.block_until_ready(
        unicode_characters_embedding(toks2, tci, char_weight, tb=512))
    ref2 = char_weight[tci[toks2.reshape(-1)]].reshape(bsz2, seq_len2, embedding_dim)
    assert out2.shape == (bsz2, seq_len2, embedding_dim)
    assert jnp.allclose(out2, ref2, atol=1e-6), "mismatch vs reference (case 2)"

    print("KERNEL_OK")
</pallas_src>

<mosaic_0001>
module attributes {stable_mosaic.version = 11 : i64} {
  func.func @_unichar_kernel(%arg0: i32, %arg1: memref<1x128x4xi32, #tpu.memory_space<vmem>>, %arg2: memref<64x32xf32, #tpu.memory_space<vmem>>, %arg3: memref<128x128xf32, #tpu.memory_space<vmem>>) attributes {dimension_semantics = [#tpu.dimension_semantics<parallel>], iteration_bounds = array<i64: 1>, scalar_prefetch = 0 : i64, scratch_operands = 0 : i64, tpu.core_type = #tpu.core_type<tc>, window_params = [{transform_indices = @transform_0, window_bounds = array<i64: 1, 128, 4>}, {pipeline_mode = #tpu.pipeline_mode<synchronous>, transform_indices = @transform_1, window_bounds = array<i64: 64, 32>}, {transform_indices = @transform_2, window_bounds = array<i64: 128, 128>}]} {
    %c0 = arith.constant 0 : index
    %c0_0 = arith.constant 0 : index
    %c0_1 = arith.constant 0 : index
    %0 = vector.load %arg1[%c0, %c0_0, %c0_1] : memref<1x128x4xi32, #tpu.memory_space<vmem>>, vector<1x128x4xi32>
    %1 = vector.shape_cast %0 : vector<1x128x4xi32> to vector<128x4xi32>
    %c0_2 = arith.constant 0 : index
    %c0_3 = arith.constant 0 : index
    %2 = vector.load %arg2[%c0_2, %c0_3] : memref<64x32xf32, #tpu.memory_space<vmem>>, vector<64x32xf32>
    %3 = tpu.iota {dimensions = array<i32: 1>} : vector<1x64xi32>
    %4 = vector.extract_strided_slice %1 {offsets = [0, 0], sizes = [128, 1], strides = [1, 1]} : vector<128x4xi32> to vector<128x1xi32>
    %5 = vector.broadcast %4 : vector<128x1xi32> to vector<128x64xi32>
    %6 = vector.broadcast %3 : vector<1x64xi32> to vector<128x64xi32>
    %7 = arith.cmpi eq, %5, %6 : vector<128x64xi32>
    %8 = arith.extui %7 : vector<128x64xi1> to vector<128x64xi32>
    %9 = arith.sitofp %8 : vector<128x64xi32> to vector<128x64xf32>
    %cst = arith.constant dense<0.000000e+00> : vector<128x32xf32>
    %10 = tpu.matmul %9, %2, %cst {dimension_numbers = #tpu.dot_dimension_numbers<[1], [0], [0], [1], [0, 0, 1, 1], [], []>} : vector<128x64xf32>, vector<64x32xf32>, vector<128x32xf32> -> vector<128x32xf32>
    %c0_4 = arith.constant 0 : index
    %c0_5 = arith.constant 0 : index
    %11 = vector.load %arg3[%c0_4, %c0_5] : memref<128x128xf32, #tpu.memory_space<vmem>>, vector<128x32xf32>
    tpu.vector_store %arg3[%c0_4, %c0_5], %10 {strides = array<i32>} : memref<128x128xf32, #tpu.memory_space<vmem>>, vector<128x32xf32>,
    %12 = vector.extract_strided_slice %1 {offsets = [0, 1], sizes = [128, 1], strides = [1, 1]} : vector<128x4xi32> to vector<128x1xi32>
    %13 = vector.broadcast %12 : vector<128x1xi32> to vector<128x64xi32>
    %14 = vector.broadcast %3 : vector<1x64xi32> to vector<128x64xi32>
    %15 = arith.cmpi eq, %13, %14 : vector<128x64xi32>
    %16 = arith.extui %15 : vector<128x64xi1> to vector<128x64xi32>
    %17 = arith.sitofp %16 : vector<128x64xi32> to vector<128x64xf32>
    %cst_6 = arith.constant dense<0.000000e+00> : vector<128x32xf32>
    %18 = tpu.matmul %17, %2, %cst_6 {dimension_numbers = #tpu.dot_dimension_numbers<[1], [0], [0], [1], [0, 0, 1, 1], [], []>} : vector<128x64xf32>, vector<64x32xf32>, vector<128x32xf32> -> vector<128x32xf32>
    %c0_7 = arith.constant 0 : index
    %c32 = arith.constant 32 : index
    %19 = vector.load %arg3[%c0_7, %c32] : memref<128x128xf32, #tpu.memory_space<vmem>>, vector<128x32xf32>
    tpu.vector_store %arg3[%c0_7, %c32], %18 {strides = array<i32>} : memref<128x128xf32, #tpu.memory_space<vmem>>, vector<128x32xf32>,
    %20 = vector.extract_strided_slice %1 {offsets = [0, 2], sizes = [128, 1], strides = [1, 1]} : vector<128x4xi32> to vector<128x1xi32>
    %21 = vector.broadcast %20 : vector<128x1xi32> to vector<128x64xi32>
    %22 = vector.broadcast %3 : vector<1x64xi32> to vector<128x64xi32>
    %23 = arith.cmpi eq, %21, %22 : vector<128x64xi32>
    %24 = arith.extui %23 : vector<128x64xi1> to vector<128x64xi32>
    %25 = arith.sitofp %24 : vector<128x64xi32> to vector<128x64xf32>
    %cst_8 = arith.constant dense<0.000000e+00> : vector<128x32xf32>
    %26 = tpu.matmul %25, %2, %cst_8 {dimension_numbers = #tpu.dot_dimension_numbers<[1], [0], [0], [1], [0, 0, 1, 1], [], []>} : vector<128x64xf32>, vector<64x32xf32>, vector<128x32xf32> -> vector<128x32xf32>
    %c0_9 = arith.constant 0 : index
    %c64 = arith.constant 64 : index
    %27 = vector.load %arg3[%c0_9, %c64] : memref<128x128xf32, #tpu.memory_space<vmem>>, vector<128x32xf32>
    tpu.vector_store %arg3[%c0_9, %c64], %26 {strides = array<i32>} : memref<128x128xf32, #tpu.memory_space<vmem>>, vector<128x32xf32>,
    %28 = vector.extract_strided_slice %1 {offsets = [0, 3], sizes = [128, 1], strides = [1, 1]} : vector<128x4xi32> to vector<128x1xi32>
    %29 = vector.broadcast %28 : vector<128x1xi32> to vector<128x64xi32>
    %30 = vector.broadcast %3 : vector<1x64xi32> to vector<128x64xi32>
    %31 = arith.cmpi eq, %29, %30 : vector<128x64xi32>
    %32 = arith.extui %31 : vector<128x64xi1> to vector<128x64xi32>
    %33 = arith.sitofp %32 : vector<128x64xi32> to vector<128x64xf32>
    %cst_10 = arith.constant dense<0.000000e+00> : vector<128x32xf32>
    %34 = tpu.matmul %33, %2, %cst_10 {dimension_numbers = #tpu.dot_dimension_numbers<[1], [0], [0], [1], [0, 0, 1, 1], [], []>} : vector<128x64xf32>, vector<64x32xf32>, vector<128x32xf32> -> vector<128x32xf32>
    %c0_11 = arith.constant 0 : index
    %c96 = arith.constant 96 : index
    %35 = vector.load %arg3[%c0_11, %c96] : memref<128x128xf32, #tpu.memory_space<vmem>>, vector<128x32xf32>
    tpu.vector_store %arg3[%c0_11, %c96], %34 {strides = array<i32>} : memref<128x128xf32, #tpu.memory_space<vmem>>, vector<128x32xf32>,
    return
  }
  func.func @transform_0(%arg0: i32) -> (i32, i32, i32) {
    %c0_i32 = arith.constant 0 : i32
    %c0_i32_0 = arith.constant 0 : i32
    %c0_i32_1 = arith.constant 0 : i32
    return %arg0, %c0_i32, %c0_i32_0 : i32, i32, i32
  }
  func.func @transform_1(%arg0: i32) -> (i32, i32) {
    %c0_i32 = arith.constant 0 : i32
    %c0_i32_0 = arith.constant 0 : i32
    %c0_i32_1 = arith.constant 0 : i32
    return %c0_i32, %c0_i32_0 : i32, i32
  }
  func.func @transform_2(%arg0: i32) -> (i32, i32) {
    %c0_i32 = arith.constant 0 : i32
    %c0_i32_0 = arith.constant 0 : i32
    return %arg0, %c0_i32 : i32, i32
  }
}

</mosaic_0001>

<llo_original>
// kernel: tpu_custom_call.1
$region0: #{tpu_custom_call.1}
  #allocation0 [shape = 'u32[]', space=smem, size = 0x4, offset = 0x4, fixed_abs, tag = 'smem constant byte address 0x4 - core index']
  #allocation1 [shape = 'u32[144,128]{1,0:T(1,128)}', space=vmem, size = 0x12000, scoped, tag = 'internal scratch']
  %s0 = inlined_call_operand.vmem [shape: s32[1,128,4], index: 0, kind: input, shape index: {}]
  %s1 = inlined_call_operand.vmem [shape: f32[64,32], index: 1, kind: input, shape index: {}]
  %s2 = inlined_call_operand.hbm [shape: f32[128,128], index: 2, kind: output, shape index: {}]
  %s3 = sld [smem:[#allocation0]]
  $region18: #{tpu_custom_call.1} parent=0
    _
  %s5 = ssub.s32 1, %s3
  %s6 = scalar_select 0, %s5, %s3
  $region1: #{tpu_custom_call.1} parent=0
    #allocation2 [shape = 'u8[65536]{0}', space=vmem, size = 0x10000, scoped, tag = 'output window, operand 0, single buffered']
    #allocation3 [shape = 's32[1]{0}', space=sflag, size = 0x4, scoped, tag = 'scoped memory for tpu_custom_call.1']
    %7 = vsyncpa [#allocation3], 0
    // Predicated region
    $region2: #{tpu_custom_call.1} parent=1 // pred_check
      _
    $region3: #{tpu_custom_call.1} parent=1 // pred_check_branch
      %9 = sbr.rel (0) target = $region5
    $region4: #{tpu_custom_call.1} parent=1 // pred_region
      _
    $region5: #{tpu_custom_call.1} parent=1 // pred_fallthru
      _
    // Predicated region
    $region6: #{tpu_custom_call.1} parent=1 // pred_check
      _
    $region7: #{tpu_custom_call.1} parent=1 // pred_check_branch
      %11 = sbr.rel (0) target = $region9
    $region8: #{tpu_custom_call.1} parent=1 // pred_region
      _
    $region9: #{tpu_custom_call.1} parent=1 // pred_fallthru
      _
    %v12 = vld [vmem:[%s0] sm:$0xff]
    %v13 = vld [vmem:[%s0 + $0x8] sm:$0xff]
    %v14 = vld [vmem:[%s0 + $0x10] sm:$0xff]
    %v15 = vld [vmem:[%s0 + $0x18] sm:$0xff]
    %v16 = vld [vmem:[%s0 + $0x20] sm:$0xff]
    %v17 = vld [vmem:[%s0 + $0x28] sm:$0xff]
    %v18 = vld [vmem:[%s0 + $0x30] sm:$0xff]
    %v19 = vld [vmem:[%s0 + $0x38] sm:$0xff]
    %v20 = vld [vmem:[%s0 + $0x40] sm:$0xff]
    %v21 = vld [vmem:[%s0 + $0x48] sm:$0xff]
    %v22 = vld [vmem:[%s0 + $0x50] sm:$0xff]
    %v23 = vld [vmem:[%s0 + $0x58] sm:$0xff]
    %v24 = vld [vmem:[%s0 + $0x60] sm:$0xff]
    %v25 = vld [vmem:[%s0 + $0x68] sm:$0xff]
    %v26 = vld [vmem:[%s0 + $0x70] sm:$0xff]
    %v27 = vld [vmem:[%s0 + $0x78] sm:$0xff]
    %v28 = vld [vmem:[%s1] sm:$0xff]
    %v29 = vld [vmem:[%s1 + $0x8] sm:$0xff]
    %v30 = vld [vmem:[%s1 + $0x10] sm:$0xff]
    %v31 = vld [vmem:[%s1 + $0x18] sm:$0xff]
    %v32 = vld [vmem:[%s1 + $0x20] sm:$0xff]
    %v33 = vld [vmem:[%s1 + $0x28] sm:$0xff]
    %v34 = vld [vmem:[%s1 + $0x30] sm:$0xff]
    %v35 = vld [vmem:[%s1 + $0x38] sm:$0xff]
    %v36 = vlaneseq
    %v37 = vand.u32 %v36, 127
    %38 = vset.pattern.permute.xlu0 0
    %39 = vperm.xlu0 %38, %v12
    %v40 = vpop.permute.xlu0 %39
    %41 = vset.pattern.permute.xlu0 0
    %42 = vperm.xlu0 %41, %v13
    %v43 = vpop.permute.xlu0 %42
    %44 = vset.pattern.permute.xlu0 0
    %45 = vperm.xlu0 %44, %v14
    %v46 = vpop.permute.xlu0 %45
    %47 = vset.pattern.permute.xlu0 0
    %48 = vperm.xlu0 %47, %v15
    %v49 = vpop.permute.xlu0 %48
    %50 = vset.pattern.permute.xlu0 0
    %51 = vperm.xlu0 %50, %v16
    %v52 = vpop.permute.xlu0 %51
    %53 = vset.pattern.permute.xlu0 0
    %54 = vperm.xlu0 %53, %v17
    %v55 = vpop.permute.xlu0 %54
    %56 = vset.pattern.permute.xlu0 0
    %57 = vperm.xlu0 %56, %v18
    %v58 = vpop.permute.xlu0 %57
    %59 = vset.pattern.permute.xlu0 0
    %60 = vperm.xlu0 %59, %v19
    %v61 = vpop.permute.xlu0 %60
    %62 = vset.pattern.permute.xlu0 0
    %63 = vperm.xlu0 %62, %v20
    %v64 = vpop.permute.xlu0 %63
    %65 = vset.pattern.permute.xlu0 0
    %66 = vperm.xlu0 %65, %v21
    %v67 = vpop.permute.xlu0 %66
    %68 = vset.pattern.permute.xlu0 0
    %69 = vperm.xlu0 %68, %v22
    %v70 = vpop.permute.xlu0 %69
    %71 = vset.pattern.permute.xlu0 0
    %72 = vperm.xlu0 %71, %v23
    %v73 = vpop.permute.xlu0 %72
    %74 = vset.pattern.permute.xlu0 0
    %75 = vperm.xlu0 %74, %v24
    %v76 = vpop.permute.xlu0 %75
    %77 = vset.pattern.permute.xlu0 0
    %78 = vperm.xlu0 %77, %v25
    %v79 = vpop.permute.xlu0 %78
    %80 = vset.pattern.permute.xlu0 0
    %81 = vperm.xlu0 %80, %v26
    %v82 = vpop.permute.xlu0 %81
    %83 = vset.pattern.permute.xlu0 0
    %84 = vperm.xlu0 %83, %v27
    %v85 = vpop.permute.xlu0 %84
    %vm86 = vcmp.eq.s32.totalorder %v40, %v37
    %vm87 = vcmp.eq.s32.totalorder %v43, %v37
    %vm88 = vcmp.eq.s32.totalorder %v46, %v37
    %vm89 = vcmp.eq.s32.totalorder %v49, %v37
    %vm90 = vcmp.eq.s32.totalorder %v52, %v37
    %vm91 = vcmp.eq.s32.totalorder %v55, %v37
    %vm92 = vcmp.eq.s32.totalorder %v58, %v37
    %vm93 = vcmp.eq.s32.totalorder %v61, %v37
    %vm94 = vcmp.eq.s32.totalorder %v64, %v37
    %vm95 = vcmp.eq.s32.totalorder %v67, %v37
    %vm96 = vcmp.eq.s32.totalorder %v70, %v37
    %vm97 = vcmp.eq.s32.totalorder %v73, %v37
    %vm98 = vcmp.eq.s32.totalorder %v76, %v37
    %vm99 = vcmp.eq.s32.totalorder %v79, %v37
    %vm100 = vcmp.eq.s32.totalorder %v82, %v37
    %vm101 = vcmp.eq.s32.totalorder %v85, %v37
    %v102 = vsel %vm86, 1, 0
    %v103 = vsel %vm87, 1, 0
    %v104 = vsel %vm88, 1, 0
    %v105 = vsel %vm89, 1, 0
    %v106 = vsel %vm90, 1, 0
    %v107 = vsel %vm91, 1, 0
    %v108 = vsel %vm92, 1, 0
    %v109 = vsel %vm93, 1, 0
    %v110 = vsel %vm94, 1, 0
    %v111 = vsel %vm95, 1, 0
    %v112 = vsel %vm96, 1, 0
    %v113 = vsel %vm97, 1, 0
    %v114 = vsel %vm98, 1, 0
    %v115 = vsel %vm99, 1, 0
    %v116 = vsel %vm100, 1, 0
    %v117 = vsel %vm101, 1, 0
    %v118 = vcvt.s32.f32 %v102
    %v119 = vcvt.s32.f32 %v103
    %v120 = vcvt.s32.f32 %v104
    %v121 = vcvt.s32.f32 %v105
    %v122 = vcvt.s32.f32 %v106
    %v123 = vcvt.s32.f32 %v107
    %v124 = vcvt.s32.f32 %v108
    %v125 = vcvt.s32.f32 %v109
    %v126 = vcvt.s32.f32 %v110
    %v127 = vcvt.s32.f32 %v111
    %v128 = vcvt.s32.f32 %v112
    %v129 = vcvt.s32.f32 %v113
    %v130 = vcvt.s32.f32 %v114
    %v131 = vcvt.s32.f32 %v115
    %v132 = vcvt.s32.f32 %v116
    %v133 = vcvt.s32.f32 %v117
    %vm134 = vcmask 523264
    %v136 = vsel %vm134, %v118, 0
    %v139 = vsel %vm134, %v119, 0
    %v142 = vsel %vm134, %v120, 0
    %v145 = vsel %vm134, %v121, 0
    %v148 = vsel %vm134, %v122, 0
    %v151 = vsel %vm134, %v123, 0
    %v154 = vsel %vm134, %v124, 0
    %v157 = vsel %vm134, %v125, 0
    %v160 = vsel %vm134, %v126, 0
    %v163 = vsel %vm134, %v127, 0
    %v166 = vsel %vm134, %v128, 0
    %v169 = vsel %vm134, %v129, 0
    %v172 = vsel %vm134, %v130, 0
    %v175 = vsel %vm134, %v131, 0
    %v178 = vsel %vm134, %v132, 0
    %v181 = vsel %vm134, %v133, 0
    %183 = vmatprep.subr.mxu0 0.0
    %184 = vmatpush1.msra.mxu0 %v28
    %185 = vmatprep.subr.mxu0 0.0
    %186 = vmatpush1.msra.mxu0 %v29
    %187 = vmatprep.subr.mxu0 0.0
    %188 = vmatpush1.msra.mxu0 %v30
    %189 = vmatprep.subr.mxu0 0.0
    %190 = vmatpush1.msra.mxu0 %v31
    %191 = vmatprep.subr.mxu0 0.0
    %192 = vmatpush1.msra.mxu0 %v32
    %193 = vmatprep.subr.mxu0 0.0
    %194 = vmatpush1.msra.mxu0 %v33
    %195 = vmatprep.subr.mxu0 0.0
    %196 = vmatpush1.msra.mxu0 %v34
    %197 = vmatprep.subr.mxu0 0.0
    %198 = vmatpush1.msra.mxu0 %v35
    %199 = vmatprep.subr.mxu0 0.0
    %200 = vmatpush1.msra.mxu0 0.0
    %201 = vmatprep.subr.mxu0 0.0
    %202 = vmatpush1.msra.mxu0 0.0
    %203 = vmatprep.subr.mxu0 0.0
    %204 = vmatpush1.msra.mxu0 0.0
    %205 = vmatprep.subr.mxu0 0.0
    %206 = vmatpush1.msra.mxu0 0.0
    %207 = vmatprep.subr.mxu0 0.0
    %208 = vmatpush1.msra.mxu0 0.0
    %209 = vmatprep.subr.mxu0 0.0
    %210 = vmatpush1.msra.mxu0 0.0
    %211 = vmatprep.subr.mxu0 0.0
    %212 = vmatpush1.msra.mxu0 0.0
    %213 = vmatprep.subr.mxu0 0.0
    %214 = vmatpush1.msra.mxu0 0.0
    %215 = vmatprep.subr.mxu0 0.0
    %216 = vmatpush1.msra.mxu0 0.0
    %217 = vmatprep.subr.mxu0 0.0
    %218 = vmatpush1.msra.mxu0 0.0
    %219 = vmatprep.subr.mxu0 0.0
    %220 = vmatpush1.msra.mxu0 0.0
    %221 = vmatprep.subr.mxu0 0.0
    %222 = vmatpush1.msra.mxu0 0.0
    %223 = vmatprep.subr.mxu0 0.0
    %224 = vmatpush1.msra.mxu0 0.0
    %225 = vmatprep.subr.mxu0 0.0
    %226 = vmatpush1.msra.mxu0 0.0
    %227 = vmatprep.subr.mxu0 0.0
    %228 = vmatpush1.msra.mxu0 0.0
    %229 = vmatprep.subr.mxu0 0.0
    %230 = vmatpush1.msra.mxu0 0.0
    %231 = vmatprep.subr.mxu0 0.0
    %232 = vmatpush1.msra.mxu0 0.0
    %233 = vmatprep.subr.mxu0 0.0
    %234 = vmatpush1.msra.mxu0 0.0
    %235 = vmatprep.subr.mxu0 0.0
    %236 = vmatpush1.msra.mxu0 0.0
    %237 = vmatprep.subr.mxu0 0.0
    %238 = vmatpush1.msra.mxu0 0.0
    %239 = vmatprep.subr.mxu0 0.0
    %240 = vmatpush1.msra.mxu0 0.0
    %241 = vmatprep.subr.mxu0 0.0
    %242 = vmatpush1.msra.mxu0 0.0
    %243 = vmatprep.subr.mxu0 0.0
    %244 = vmatpush1.msra.mxu0 0.0
    %245 = vmatprep.subr.mxu0 0.0
    %246 = vmatpush1.msra.mxu0 0.0
    %247 = vmatprep.mubr.f32.mxu0 0.0
    %248 = vmatmul.mubr.f32.gmra.mrb[0].mxu0 %v136
    %v249 = vpop.f32.mrb[0].mxu0
    %v250 = vadd.f32 0.0, %v249
    %v251 = vpop.f32.mrb[0].mxu0
    %252 = vmatprep.mubr.f32.mxu0 0.0
    %253 = vmatmul.mubr.f32.gmra.mrb[0].mxu0 %v139
    %v254 = vpop.f32.mrb[0].mxu0
    %v255 = vadd.f32 0.0, %v254
    %v256 = vpop.f32.mrb[0].mxu0
    %257 = vmatprep.mubr.f32.mxu0 0.0
    %258 = vmatmul.mubr.f32.gmra.mrb[0].mxu0 %v142
    %v259 = vpop.f32.mrb[0].mxu0
    %v260 = vadd.f32 0.0, %v259
    %v261 = vpop.f32.mrb[0].mxu0
    %262 = vmatprep.mubr.f32.mxu0 0.0
    %263 = vmatmul.mubr.f32.gmra.mrb[0].mxu0 %v145
    %v264 = vpop.f32.mrb[0].mxu0
    %v265 = vadd.f32 0.0, %v264
    %v266 = vpop.f32.mrb[0].mxu0
    %267 = vmatprep.mubr.f32.mxu0 0.0
    %268 = vmatmul.mubr.f32.gmra.mrb[0].mxu0 %v148
    %v269 = vpop.f32.mrb[0].mxu0
    %v270 = vadd.f32 0.0, %v269
    %v271 = vpop.f32.mrb[0].mxu0
    %272 = vmatprep.mubr.f32.mxu0 0.0
    %273 = vmatmul.mubr.f32.gmra.mrb[0].mxu0 %v151
    %v274 = vpop.f32.mrb[0].mxu0
    %v275 = vadd.f32 0.0, %v274
    %v276 = vpop.f32.mrb[0].mxu0
    %277 = vmatprep.mubr.f32.mxu0 0.0
    %278 = vmatmul.mubr.f32.gmra.mrb[0].mxu0 %v154
    %v279 = vpop.f32.mrb[0].mxu0
    %v280 = vadd.f32 0.0, %v279
    %v281 = vpop.f32.mrb[0].mxu0
    %282 = vmatprep.mubr.f32.mxu0 0.0
    %283 = vmatmul.mubr.f32.gmra.mrb[0].mxu0 %v157
    %v284 = vpop.f32.mrb[0].mxu0
    %v285 = vadd.f32 0.0, %v284
    %v286 = vpop.f32.mrb[0].mxu0
    %287 = vmatprep.mubr.f32.mxu0 0.0
    %288 = vmatmul.mubr.f32.gmra.mrb[0].mxu0 %v160
    %v289 = vpop.f32.mrb[0].mxu0
    %v290 = vadd.f32 0.0, %v289
    %v291 = vpop.f32.mrb[0].mxu0
    %292 = vmatprep.mubr.f32.mxu0 0.0
    %293 = vmatmul.mubr.f32.gmra.mrb[0].mxu0 %v163
    %v294 = vpop.f32.mrb[0].mxu0
    %v295 = vadd.f32 0.0, %v294
    %v296 = vpop.f32.mrb[0].mxu0
    %297 = vmatprep.mubr.f32.mxu0 0.0
    %298 = vmatmul.mubr.f32.gmra.mrb[0].mxu0 %v166
    %v299 = vpop.f32.mrb[0].mxu0
    %v300 = vadd.f32 0.0, %v299
    %v301 = vpop.f32.mrb[0].mxu0
    %302 = vmatprep.mubr.f32.mxu0 0.0
    %303 = vmatmul.mubr.f32.gmra.mrb[0].mxu0 %v169
    %v304 = vpop.f32.mrb[0].mxu0
    %v305 = vadd.f32 0.0, %v304
    %v306 = vpop.f32.mrb[0].mxu0
    %307 = vmatprep.mubr.f32.mxu0 0.0
    %308 = vmatmul.mubr.f32.gmra.mrb[0].mxu0 %v172
    %v309 = vpop.f32.mrb[0].mxu0
    %v310 = vadd.f32 0.0, %v309
    %v311 = vpop.f32.mrb[0].mxu0
    %312 = vmatprep.mubr.f32.mxu0 0.0
    %313 = vmatmul.mubr.f32.gmra.mrb[0].mxu0 %v175
    %v314 = vpop.f32.mrb[0].mxu0
    %v315 = vadd.f32 0.0, %v314
    %v316 = vpop.f32.mrb[0].mxu0
    %317 = vmatprep.mubr.f32.mxu0 0.0
    %318 = vmatmul.mubr.f32.gmra.mrb[0].mxu0 %v178
    %v319 = vpop.f32.mrb[0].mxu0
    %v320 = vadd.f32 0.0, %v319
    %v321 = vpop.f32.mrb[0].mxu0
    %322 = vmatprep.mubr.f32.mxu0 0.0
    %323 = vmatmul.mubr.f32.gmra.mrb[0].mxu0 %v181
    %v324 = vpop.f32.mrb[0].mxu0
    %v325 = vadd.f32 0.0, %v324
    %v326 = vpop.f32.mrb[0].mxu0
    %327 = vdwg.mxu0
    %vm328 = vcmask 261120
    %329 = vst.msk [vmem:[#allocation2] sm:$0xff] %vm328, %v250
    %330 = vst.msk [vmem:[#allocation2 + $0x8] sm:$0xff] %vm328, %v255
    %331 = vst.msk [vmem:[#allocation2 + $0x10] sm:$0xff] %vm328, %v260
    %332 = vst.msk [vmem:[#allocation2 + $0x18] sm:$0xff] %vm328, %v265
    %333 = vst.msk [vmem:[#allocation2 + $0x20] sm:$0xff] %vm328, %v270
    %334 = vst.msk [vmem:[#allocation2 + $0x28] sm:$0xff] %vm328, %v275
    %335 = vst.msk [vmem:[#allocation2 + $0x30] sm:$0xff] %vm328, %v280
    %336 = vst.msk [vmem:[#allocation2 + $0x38] sm:$0xff] %vm328, %v285
    %337 = vst.msk [vmem:[#allocation2 + $0x40] sm:$0xff] %vm328, %v290
    %338 = vst.msk [vmem:[#allocation2 + $0x48] sm:$0xff] %vm328, %v295
    %339 = vst.msk [vmem:[#allocation2 + $0x50] sm:$0xff] %vm328, %v300
    %340 = vst.msk [vmem:[#allocation2 + $0x58] sm:$0xff] %vm328, %v305
    %341 = vst.msk [vmem:[#allocation2 + $0x60] sm:$0xff] %vm328, %v310
    %342 = vst.msk [vmem:[#allocation2 + $0x68] sm:$0xff] %vm328, %v315
    %343 = vst.msk [vmem:[#allocation2 + $0x70] sm:$0xff] %vm328, %v320
    %344 = vst.msk [vmem:[#allocation2 + $0x78] sm:$0xff] %vm328, %v325
    %345 = vset.pattern.permute.xlu0 1
    %346 = vperm.xlu0 %345, %v12
    %v347 = vpop.permute.xlu0 %346
    %348 = vset.pattern.permute.xlu0 1
    %349 = vperm.xlu0 %348, %v13
    %v350 = vpop.permute.xlu0 %349
    %351 = vset.pattern.permute.xlu0 1
    %352 = vperm.xlu0 %351, %v14
    %v353 = vpop.permute.xlu0 %352
    %354 = vset.pattern.permute.xlu0 1
    %355 = vperm.xlu0 %354, %v15
    %v356 = vpop.permute.xlu0 %355
    %357 = vset.pattern.permute.xlu0 1
    %358 = vperm.xlu0 %357, %v16
    %v359 = vpop.permute.xlu0 %358
    %360 = vset.pattern.permute.xlu0 1
    %361 = vperm.xlu0 %360, %v17
    %v362 = vpop.permute.xlu0 %361
    %363 = vset.pattern.permute.xlu0 1
    %364 = vperm.xlu0 %363, %v18
    %v365 = vpop.permute.xlu0 %364
    %366 = vset.pattern.permute.xlu0 1
    %367 = vperm.xlu0 %366, %v19
    %v368 = vpop.permute.xlu0 %367
    %369 = vset.pattern.permute.xlu0 1
    %370 = vperm.xlu0 %369, %v20
    %v371 = vpop.permute.xlu0 %370
    %372 = vset.pattern.permute.xlu0 1
    %373 = vperm.xlu0 %372, %v21
    %v374 = vpop.permute.xlu0 %373
    %375 = vset.pattern.permute.xlu0 1
    %376 = vperm.xlu0 %375, %v22
    %v377 = vpop.permute.xlu0 %376
    %378 = vset.pattern.permute.xlu0 1
    %379 = vperm.xlu0 %378, %v23
    %v380 = vpop.permute.xlu0 %379
    %381 = vset.pattern.permute.xlu0 1
    %382 = vperm.xlu0 %381, %v24
    %v383 = vpop.permute.xlu0 %382
    %384 = vset.pattern.permute.xlu0 1
    %385 = vperm.xlu0 %384, %v25
    %v386 = vpop.permute.xlu0 %385
    %387 = vset.pattern.permute.xlu0 1
    %388 = vperm.xlu0 %387, %v26
    %v389 = vpop.permute.xlu0 %388
    %390 = vset.pattern.permute.xlu0 1
    %391 = vperm.xlu0 %390, %v27
    %v392 = vpop.permute.xlu0 %391
    %vm393 = vcmp.eq.s32.totalorder %v347, %v37
    %vm394 = vcmp.eq.s32.totalorder %v350, %v37
    %vm395 = vcmp.eq.s32.totalorder %v353, %v37
    %vm396 = vcmp.eq.s32.totalorder %v356, %v37
    %vm397 = vcmp.eq.s32.totalorder %v359, %v37
    %vm398 = vcmp.eq.s32.totalorder %v362, %v37
    %vm399 = vcmp.eq.s32.totalorder %v365, %v37
    %vm400 = vcmp.eq.s32.totalorder %v368, %v37
    %vm401 = vcmp.eq.s32.totalorder %v371, %v37
    %vm402 = vcmp.eq.s32.totalorder %v374, %v37
    %vm403 = vcmp.eq.s32.totalorder %v377, %v37
    %vm404 = vcmp.eq.s32.totalorder %v380, %v37
    %vm405 = vcmp.eq.s32.totalorder %v383, %v37
    %vm406 = vcmp.eq.s32.totalorder %v386, %v37
    %vm407 = vcmp.eq.s32.totalorder %v389, %v37
    %vm408 = vcmp.eq.s32.totalorder %v392, %v37
    %v409 = vsel %vm393, 1, 0
    %v410 = vsel %vm394, 1, 0
    %v411 = vsel %vm395, 1, 0
    %v412 = vsel %vm396, 1, 0
    %v413 = vsel %vm397, 1, 0
    %v414 = vsel %vm398, 1, 0
    %v415 = vsel %vm399, 1, 0
    %v416 = vsel %vm400, 1, 0
    %v417 = vsel %vm401, 1, 0
    %v418 = vsel %vm402, 1, 0
    %v419 = vsel %vm403, 1, 0
    %v420 = vsel %vm404, 1, 0
    %v421 = vsel %vm405, 1, 0
    %v422 = vsel %vm406, 1, 0
    %v423 = vsel %vm407, 1, 0
    %v424 = vsel %vm408, 1, 0
    %v425 = vcvt.s32.f32 %v409
    %v426 = vcvt.s32.f32 %v410
    %v427 = vcvt.s32.f32 %v411
    %v428 = vcvt.s32.f32 %v412
    %v429 = vcvt.s32.f32 %v413
    %v430 = vcvt.s32.f32 %v414
    %v431 = vcvt.s32.f32 %v415
    %v432 = vcvt.s32.f32 %v416
    %v433 = vcvt.s32.f32 %v417
    %v434 = vcvt.s32.f32 %v418
    %v435 = vcvt.s32.f32 %v419
    %v436 = vcvt.s32.f32 %v420
    %v437 = vcvt.s32.f32 %v421
    %v438 = vcvt.s32.f32 %v422
    %v439 = vcvt.s32.f32 %v423
    %v440 = vcvt.s32.f32 %v424
    %v442 = vsel %vm134, %v425, 0
    %v445 = vsel %vm134, %v426, 0
    %v448 = vsel %vm134, %v427, 0
    %v451 = vsel %vm134, %v428, 0
    %v454 = vsel %vm134, %v429, 0
    %v457 = vsel %vm134, %v430, 0
    %v460 = vsel %vm134, %v431, 0
    %v463 = vsel %vm134, %v432, 0
    %v466 = vsel %vm134, %v433, 0
    %v469 = vsel %vm134, %v434, 0
    %v472 = vsel %vm134, %v435, 0
    %v475 = vsel %vm134, %v436, 0
    %v478 = vsel %vm134, %v437, 0
    %v481 = vsel %vm134, %v438, 0
    %v484 = vsel %vm134, %v439, 0
    %v487 = vsel %vm134, %v440, 0
    %489 = vmatprep.subr.mxu0 0.0
    %490 = vmatpush1.msra.mxu0 %v28
    %491 = vmatprep.subr.mxu0 0.0
    %492 = vmatpush1.msra.mxu0 %v29
    %493 = vmatprep.subr.mxu0 0.0
    %494 = vmatpush1.msra.mxu0 %v30
    %495 = vmatprep.subr.mxu0 0.0
    %496 = vmatpush1.msra.mxu0 %v31
    %497 = vmatprep.subr.mxu0 0.0
    %498 = vmatpush1.msra.mxu0 %v32
    %499 = vmatprep.subr.mxu0 0.0
    %500 = vmatpush1.msra.mxu0 %v33
    %501 = vmatprep.subr.mxu0 0.0
    %502 = vmatpush1.msra.mxu0 %v34
    %503 = vmatprep.subr.mxu0 0.0
    %504 = vmatpush1.msra.mxu0 %v35
    %505 = vmatprep.subr.mxu0 0.0
    %506 = vmatpush1.msra.mxu0 0.0
    %507 = vmatprep.subr.mxu0 0.0
    %508 = vmatpush1.msra.mxu0 0.0
    %509 = vmatprep.subr.mxu0 0.0
    %510 = vmatpush1.msra.mxu0 0.0
    %511 = vmatprep.subr.mxu0 0.0
    %512 = vmatpush1.msra.mxu0 0.0
    %513 = vmatprep.subr.mxu0 0.0
    %514 = vmatpush1.msra.mxu0 0.0
    %515 = vmatprep.subr.mxu0 0.0
    %516 = vmatpush1.msra.mxu0 0.0
    %517 = vmatprep.subr.mxu0 0.0
    %518 = vmatpush1.msra.mxu0 0.0
    %519 = vmatprep.subr.mxu0 0.0
    %520 = vmatpush1.msra.mxu0 0.0
    %521 = vmatprep.subr.mxu0 0.0
    %522 = vmatpush1.msra.mxu0 0.0
    %523 = vmatprep.subr.mxu0 0.0
    %524 = vmatpush1.msra.mxu0 0.0
    %525 = vmatprep.subr.mxu0 0.0
    %526 = vmatpush1.msra.mxu0 0.0
    %527 = vmatprep.subr.mxu0 0.0
    %528 = vmatpush1.msra.mxu0 0.0
    %529 = vmatprep.subr.mxu0 0.0
    %530 = vmatpush1.msra.mxu0 0.0
    %531 = vmatprep.subr.mxu0 0.0
    %532 = vmatpush1.msra.mxu0 0.0
    %533 = vmatprep.subr.mxu0 0.0
    %534 = vmatpush1.msra.mxu0 0.0
    %535 = vmatprep.subr.mxu0 0.0
    %536 = vmatpush1.msra.mxu0 0.0
    %537 = vmatprep.subr.mxu0 0.0
    %538 = vmatpush1.msra.mxu0 0.0
    %539 = vmatprep.subr.mxu0 0.0
    %540 = vmatpush1.msra.mxu0 0.0
    %541 = vmatprep.subr.mxu0 0.0
    %542 = vmatpush1.msra.mxu0 0.0
    %543 = vmatprep.subr.mxu0 0.0
    %544 = vmatpush1.msra.mxu0 0.0
    %545 = vmatprep.subr.mxu0 0.0
    %546 = vmatpush1.msra.mxu0 0.0
    %547 = vmatprep.subr.mxu0 0.0
    %548 = vmatpush1.msra.mxu0 0.0
    %549 = vmatprep.subr.mxu0 0.0
    %550 = vmatpush1.msra.mxu0 0.0
    %551 = vmatprep.subr.mxu0 0.0
    %552 = vmatpush1.msra.mxu0 0.0
    %553 = vmatprep.mubr.f32.mxu0 0.0
    %554 = vmatmul.mubr.f32.gmra.mrb[0].mxu0 %v442
    %v555 = vpop.f32.mrb[0].mxu0
    %v556 = vadd.f32 0.0, %v555
    %v557 = vpop.f32.mrb[0].mxu0
    %558 = vmatprep.mubr.f32.mxu0 0.0
    %559 = vmatmul.mubr.f32.gmra.mrb[0].mxu0 %v445
    %v560 = vpop.f32.mrb[0].mxu0
    %v561 = vadd.f32 0.0, %v560
    %v562 = vpop.f32.mrb[0].mxu0
    %563 = vmatprep.mubr.f32.mxu0 0.0
    %564 = vmatmul.mubr.f32.gmra.mrb[0].mxu0 %v448
    %v565 = vpop.f32.mrb[0].mxu0
    %v566 = vadd.f32 0.0, %v565
    %v567 = vpop.f32.mrb[0].mxu0
    %568 = vmatprep.mubr.f32.mxu0 0.0
    %569 = vmatmul.mubr.f32.gmra.mrb[0].mxu0 %v451
    %v570 = vpop.f32.mrb[0].mxu0
    %v571 = vadd.f32 0.0, %v570
    %v572 = vpop.f32.mrb[0].mxu0
    %573 = vmatprep.mubr.f32.mxu0 0.0
    %574 = vmatmul.mubr.f32.gmra.mrb[0].mxu0 %v454
    %v575 = vpop.f32.mrb[0].mxu0
    %v576 = vadd.f32 0.0, %v575
    %v577 = vpop.f32.mrb[0].mxu0
    %578 = vmatprep.mubr.f32.mxu0 0.0
    %579 = vmatmul.mubr.f32.gmra.mrb[0].mxu0 %v457
    %v580 = vpop.f32.mrb[0].mxu0
    %v581 = vadd.f32 0.0, %v580
    %v582 = vpop.f32.mrb[0].mxu0
    %583 = vmatprep.mubr.f32.mxu0 0.0
    %584 = vmatmul.mubr.f32.gmra.mrb[0].mxu0 %v460
    %v585 = vpop.f32.mrb[0].mxu0
    %v586 = vadd.f32 0.0, %v585
    %v587 = vpop.f32.mrb[0].mxu0
    %588 = vmatprep.mubr.f32.mxu0 0.0
    %589 = vmatmul.mubr.f32.gmra.mrb[0].mxu0 %v463
    %v590 = vpop.f32.mrb[0].mxu0
    %v591 = vadd.f32 0.0, %v590
    %v592 = vpop.f32.mrb[0].mxu0
    %593 = vmatprep.mubr.f32.mxu0 0.0
    %594 = vmatmul.mubr.f32.gmra.mrb[0].mxu0 %v466
    %v595 = vpop.f32.mrb[0].mxu0
    %v596 = vadd.f32 0.0, %v595
    %v597 = vpop.f32.mrb[0].mxu0
    %598 = vmatprep.mubr.f32.mxu0 0.0
    %599 = vmatmul.mubr.f32.gmra.mrb[0].mxu0 %v469
    %v600 = vpop.f32.mrb[0].mxu0
    %v601 = vadd.f32 0.0, %v600
    %v602 = vpop.f32.mrb[0].mxu0
    %603 = vmatprep.mubr.f32.mxu0 0.0
    %604 = vmatmul.mubr.f32.gmra.mrb[0].mxu0 %v472
    %v605 = vpop.f32.mrb[0].mxu0
    %v606 = vadd.f32 0.0, %v605
    %v607 = vpop.f32.mrb[0].mxu0
    %608 = vmatprep.mubr.f32.mxu0 0.0
    %609 = vmatmul.mubr.f32.gmra.mrb[0].mxu0 %v475
    %v610 = vpop.f32.mrb[0].mxu0
    %v611 = vadd.f32 0.0, %v610
    %v612 = vpop.f32.mrb[0].mxu0
    %613 = vmatprep.mubr.f32.mxu0 0.0
    %614 = vmatmul.mubr.f32.gmra.mrb[0].mxu0 %v478
    %v615 = vpop.f32.mrb[0].mxu0
    %v616 = vadd.f32 0.0, %v615
    %v617 = vpop.f32.mrb[0].mxu0
    %618 = vmatprep.mubr.f32.mxu0 0.0
    %619 = vmatmul.mubr.f32.gmra.mrb[0].mxu0 %v481
    %v620 = vpop.f32.mrb[0].mxu0
    %v621 = vadd.f32 0.0, %v620
    %v622 = vpop.f32.mrb[0].mxu0
    %623 = vmatprep.mubr.f32.mxu0 0.0
    %624 = vmatmul.mubr.f32.gmra.mrb[0].mxu0 %v484
    %v625 = vpop.f32.mrb[0].mxu0
    %v626 = vadd.f32 0.0, %v625
    %v627 = vpop.f32.mrb[0].mxu0
    %628 = vmatprep.mubr.f32.mxu0 0.0
    %629 = vmatmul.mubr.f32.gmra.mrb[0].mxu0 %v487
    %v630 = vpop.f32.mrb[0].mxu0
    %v631 = vadd.f32 0.0, %v630
    %v632 = vpop.f32.mrb[0].mxu0
    %633 = vdwg.mxu0
    %650 = vrot.lane.b32.xlu0 %v556, 32
    %v651 = vpop.permute.xlu0 %650
    %652 = vrot.lane.b32.xlu0 %v561, 32
    %v653 = vpop.permute.xlu0 %652
    %654 = vrot.lane.b32.xlu0 %v566, 32
    %v655 = vpop.permute.xlu0 %654
    %656 = vrot.lane.b32.xlu0 %v571, 32
    %v657 = vpop.permute.xlu0 %656
    %658 = vrot.lane.b32.xlu0 %v576, 32
    %v659 = vpop.permute.xlu0 %658
    %660 = vrot.lane.b32.xlu0 %v581, 32
    %v661 = vpop.permute.xlu0 %660
    %662 = vrot.lane.b32.xlu0 %v586, 32
    %v663 = vpop.permute.xlu0 %662
    %664 = vrot.lane.b32.xlu0 %v591, 32
    %v665 = vpop.permute.xlu0 %664
    %666 = vrot.lane.b32.xlu0 %v596, 32
    %v667 = vpop.permute.xlu0 %666
    %668 = vrot.lane.b32.xlu0 %v601, 32
    %v669 = vpop.permute.xlu0 %668
    %670 = vrot.lane.b32.xlu0 %v606, 32
    %v671 = vpop.permute.xlu0 %670
    %672 = vrot.lane.b32.xlu0 %v611, 32
    %v673 = vpop.permute.xlu0 %672
    %674 = vrot.lane.b32.xlu0 %v616, 32
    %v675 = vpop.permute.xlu0 %674
    %676 = vrot.lane.b32.xlu0 %v621, 32
    %v677 = vpop.permute.xlu0 %676
    %678 = vrot.lane.b32.xlu0 %v626, 32
    %v679 = vpop.permute.xlu0 %678
    %680 = vrot.lane.b32.xlu0 %v631, 32
    %v681 = vpop.permute.xlu0 %680
    %vm698 = vcmask 523520
    %699 = vst.msk [vmem:[#allocation2] sm:$0xff] %vm698, %v651
    %700 = vst.msk [vmem:[#allocation2 + $0x8] sm:$0xff] %vm698, %v653
    %701 = vst.msk [vmem:[#allocation2 + $0x10] sm:$0xff] %vm698, %v655
    %702 = vst.msk [vmem:[#allocation2 + $0x18] sm:$0xff] %vm698, %v657
    %703 = vst.msk [vmem:[#allocation2 + $0x20] sm:$0xff] %vm698, %v659
    %704 = vst.msk [vmem:[#allocation2 + $0x28] sm:$0xff] %vm698, %v661
    %705 = vst.msk [vmem:[#allocation2 + $0x30] sm:$0xff] %vm698, %v663
    %706 = vst.msk [vmem:[#allocation2 + $0x38] sm:$0xff] %vm698, %v665
    %707 = vst.msk [vmem:[#allocation2 + $0x40] sm:$0xff] %vm698, %v667
    %708 = vst.msk [vmem:[#allocation2 + $0x48] sm:$0xff] %vm698, %v669
    %709 = vst.msk [vmem:[#allocation2 + $0x50] sm:$0xff] %vm698, %v671
    %710 = vst.msk [vmem:[#allocation2 + $0x58] sm:$0xff] %vm698, %v673
    %711 = vst.msk [vmem:[#allocation2 + $0x60] sm:$0xff] %vm698, %v675
    %712 = vst.msk [vmem:[#allocation2 + $0x68] sm:$0xff] %vm698, %v677
    %713 = vst.msk [vmem:[#allocation2 + $0x70] sm:$0xff] %vm698, %v679
    %714 = vst.msk [vmem:[#allocation2 + $0x78] sm:$0xff] %vm698, %v681
    %715 = vset.pattern.permute.xlu0 2
    %716 = vperm.xlu0 %715, %v12
    %v717 = vpop.permute.xlu0 %716
    %718 = vset.pattern.permute.xlu0 2
    %719 = vperm.xlu0 %718, %v13
    %v720 = vpop.permute.xlu0 %719
    %721 = vset.pattern.permute.xlu0 2
    %722 = vperm.xlu0 %721, %v14
    %v723 = vpop.permute.xlu0 %722
    %724 = vset.pattern.permute.xlu0 2
    %725 = vperm.xlu0 %724, %v15
    %v726 = vpop.permute.xlu0 %725
    %727 = vset.pattern.permute.xlu0 2
    %728 = vperm.xlu0 %727, %v16
    %v729 = vpop.permute.xlu0 %728
    %730 = vset.pattern.permute.xlu0 2
    %731 = vperm.xlu0 %730, %v17
    %v732 = vpop.permute.xlu0 %731
    %733 = vset.pattern.permute.xlu0 2
    %734 = vperm.xlu0 %733, %v18
    %v735 = vpop.permute.xlu0 %734
    %736 = vset.pattern.permute.xlu0 2
    %737 = vperm.xlu0 %736, %v19
    %v738 = vpop.permute.xlu0 %737
    %739 = vset.pattern.permute.xlu0 2
    %740 = vperm.xlu0 %739, %v20
    %v741 = vpop.permute.xlu0 %740
    %742 = vset.pattern.permute.xlu0 2
    %743 = vperm.xlu0 %742, %v21
    %v744 = vpop.permute.xlu0 %743
    %745 = vset.pattern.permute.xlu0 2
    %746 = vperm.xlu0 %745, %v22
    %v747 = vpop.permute.xlu0 %746
    %748 = vset.pattern.permute.xlu0 2
    %749 = vperm.xlu0 %748, %v23
    %v750 = vpop.permute.xlu0 %749
    %751 = vset.pattern.permute.xlu0 2
    %752 = vperm.xlu0 %751, %v24
    %v753 = vpop.permute.xlu0 %752
    %754 = vset.pattern.permute.xlu0 2
    %755 = vperm.xlu0 %754, %v25
    %v756 = vpop.permute.xlu0 %755
    %757 = vset.pattern.permute.xlu0 2
    %758 = vperm.xlu0 %757, %v26
    %v759 = vpop.permute.xlu0 %758
    %760 = vset.pattern.permute.xlu0 2
    %761 = vperm.xlu0 %760, %v27
    %v762 = vpop.permute.xlu0 %761
    %vm763 = vcmp.eq.s32.totalorder %v717, %v37
    %vm764 = vcmp.eq.s32.totalorder %v720, %v37
    %vm765 = vcmp.eq.s32.totalorder %v723, %v37
    %vm766 = vcmp.eq.s32.totalorder %v726, %v37
    %vm767 = vcmp.eq.s32.totalorder %v729, %v37
    %vm768 = vcmp.eq.s32.totalorder %v732, %v37
    %vm769 = vcmp.eq.s32.totalorder %v735, %v37
    %vm770 = vcmp.eq.s32.totalorder %v738, %v37
    %vm771 = vcmp.eq.s32.totalorder %v741, %v37
    %vm772 = vcmp.eq.s32.totalorder %v744, %v37
    %vm773 = vcmp.eq.s32.totalorder %v747, %v37
    %vm774 = vcmp.eq.s32.totalorder %v750, %v37
    %vm775 = vcmp.eq.s32.totalorder %v753, %v37
    %vm776 = vcmp.eq.s32.totalorder %v756, %v37
    %vm777 = vcmp.eq.s32.totalorder %v759, %v37
    %vm778 = vcmp.eq.s32.totalorder %v762, %v37
    %v779 = vsel %vm763, 1, 0
    %v780 = vsel %vm764, 1, 0
    %v781 = vsel %vm765, 1, 0
    %v782 = vsel %vm766, 1, 0
    %v783 = vsel %vm767, 1, 0
    %v784 = vsel %vm768, 1, 0
    %v785 = vsel %vm769, 1, 0
    %v786 = vsel %vm770, 1, 0
    %v787 = vsel %vm771, 1, 0
    %v788 = vsel %vm772, 1, 0
    %v789 = vsel %vm773, 1, 0
    %v790 = vsel %vm774, 1, 0
    %v791 = vsel %vm775, 1, 0
    %v792 = vsel %vm776, 1, 0
    %v793 = vsel %vm777, 1, 0
    %v794 = vsel %vm778, 1, 0
    %v795 = vcvt.s32.f32 %v779
    %v796 = vcvt.s32.f32 %v780
    %v797 = vcvt.s32.f32 %v781
    %v798 = vcvt.s32.f32 %v782
    %v799 = vcvt.s32.f32 %v783
    %v800 = vcvt.s32.f32 %v784
    %v801 = vcvt.s32.f32 %v785
    %v802 = vcvt.s32.f32 %v786
    %v803 = vcvt.s32.f32 %v787
    %v804 = vcvt.s32.f32 %v788
    %v805 = vcvt.s32.f32 %v789
    %v806 = vcvt.s32.f32 %v790
    %v807 = vcvt.s32.f32 %v791
    %v808 = vcvt.s32.f32 %v792
    %v809 = vcvt.s32.f32 %v793
    %v810 = vcvt.s32.f32 %v794
    %v812 = vsel %vm134, %v795, 0
    %v815 = vsel %vm134, %v796, 0
    %v818 = vsel %vm134, %v797, 0
    %v821 = vsel %vm134, %v798, 0
    %v824 = vsel %vm134, %v799, 0
    %v827 = vsel %vm134, %v800, 0
    %v830 = vsel %vm134, %v801, 0
    %v833 = vsel %vm134, %v802, 0
    %v836 = vsel %vm134, %v803, 0
    %v839 = vsel %vm134, %v804, 0
    %v842 = vsel %vm134, %v805, 0
    %v845 = vsel %vm134, %v806, 0
    %v848 = vsel %vm134, %v807, 0
    %v851 = vsel %vm134, %v808, 0
    %v854 = vsel %vm134, %v809, 0
    %v857 = vsel %vm134, %v810, 0
    %859 = vmatprep.subr.mxu0 0.0
    %860 = vmatpush1.msra.mxu0 %v28
    %861 = vmatprep.subr.mxu0 0.0
    %862 = vmatpush1.msra.mxu0 %v29
    %863 = vmatprep.subr.mxu0 0.0
    %864 = vmatpush1.msra.mxu0 %v30
    %865 = vmatprep.subr.mxu0 0.0
    %866 = vmatpush1.msra.mxu0 %v31
    %867 = vmatprep.subr.mxu0 0.0
    %868 = vmatpush1.msra.mxu0 %v32
    %869 = vmatprep.subr.mxu0 0.0
    %870 = vmatpush1.msra.mxu0 %v33
    %871 = vmatprep.subr.mxu0 0.0
    %872 = vmatpush1.msra.mxu0 %v34
    %873 = vmatprep.subr.mxu0 0.0
    %874 = vmatpush1.msra.mxu0 %v35
    %875 = vmatprep.subr.mxu0 0.0
    %876 = vmatpush1.msra.mxu0 0.0
    %877 = vmatprep.subr.mxu0 0.0
    %878 = vmatpush1.msra.mxu0 0.0
    %879 = vmatprep.subr.mxu0 0.0
    %880 = vmatpush1.msra.mxu0 0.0
    %881 = vmatprep.subr.mxu0 0.0
    %882 = vmatpush1.msra.mxu0 0.0
    %883 = vmatprep.subr.mxu0 0.0
    %884 = vmatpush1.msra.mxu0 0.0
    %885 = vmatprep.subr.mxu0 0.0
    %886 = vmatpush1.msra.mxu0 0.0
    %887 = vmatprep.subr.mxu0 0.0
    %888 = vmatpush1.msra.mxu0 0.0
    %889 = vmatprep.subr.mxu0 0.0
    %890 = vmatpush1.msra.mxu0 0.0
    %891 = vmatprep.subr.mxu0 0.0
    %892 = vmatpush1.msra.mxu0 0.0
    %893 = vmatprep.subr.mxu0 0.0
    %894 = vmatpush1.msra.mxu0 0.0
    %895 = vmatprep.subr.mxu0 0.0
    %896 = vmatpush1.msra.mxu0 0.0
    %897 = vmatprep.subr.mxu0 0.0
    %898 = vmatpush1.msra.mxu0 0.0
    %899 = vmatprep.subr.mxu0 0.0
    %900 = vmatpush1.msra.mxu0 0.0
    %901 = vmatprep.subr.mxu0 0.0
    %902 = vmatpush1.msra.mxu0 0.0
    %903 = vmatprep.subr.mxu0 0.0
    %904 = vmatpush1.msra.mxu0 0.0
    %905 = vmatprep.subr.mxu0 0.0
    %906 = vmatpush1.msra.mxu0 0.0
    %907 = vmatprep.subr.mxu0 0.0
    %908 = vmatpush1.msra.mxu0 0.0
    %909 = vmatprep.subr.mxu0 0.0
    %910 = vmatpush1.msra.mxu0 0.0
    %911 = vmatprep.subr.mxu0 0.0
    %912 = vmatpush1.msra.mxu0 0.0
    %913 = vmatprep.subr.mxu0 0.0
    %914 = vmatpush1.msra.mxu0 0.0
    %915 = vmatprep.subr.mxu0 0.0
    %916 = vmatpush1.msra.mxu0 0.0
    %917 = vmatprep.subr.mxu0 0.0
    %918 = vmatpush1.msra.mxu0 0.0
    %919 = vmatprep.subr.mxu0 0.0
    %920 = vmatpush1.msra.mxu0 0.0
    %921 = vmatprep.subr.mxu0 0.0
    %922 = vmatpush1.msra.mxu0 0.0
    %923 = vmatprep.mubr.f32.mxu0 0.0
    %924 = vmatmul.mubr.f32.gmra.mrb[0].mxu0 %v812
    %v925 = vpop.f32.mrb[0].mxu0
    %v926 = vadd.f32 0.0, %v925
    %v927 = vpop.f32.mrb[0].mxu0
    %928 = vmatprep.mubr.f32.mxu0 0.0
    %929 = vmatmul.mubr.f32.gmra.mrb[0].mxu0 %v815
    %v930 = vpop.f32.mrb[0].mxu0
    %v931 = vadd.f32 0.0, %v930
    %v932 = vpop.f32.mrb[0].mxu0
    %933 = vmatprep.mubr.f32.mxu0 0.0
    %934 = vmatmul.mubr.f32.gmra.mrb[0].mxu0 %v818
    %v935 = vpop.f32.mrb[0].mxu0
    %v936 = vadd.f32 0.0, %v935
    %v937 = vpop.f32.mrb[0].mxu0
    %938 = vmatprep.mubr.f32.mxu0 0.0
    %939 = vmatmul.mubr.f32.gmra.mrb[0].mxu0 %v821
    %v940 = vpop.f32.mrb[0].mxu0
    %v941 = vadd.f32 0.0, %v940
    %v942 = vpop.f32.mrb[0].mxu0
    %943 = vmatprep.mubr.f32.mxu0 0.0
    %944 = vmatmul.mubr.f32.gmra.mrb[0].mxu0 %v824
    %v945 = vpop.f32.mrb[0].mxu0
    %v946 = vadd.f32 0.0, %v945
    %v947 = vpop.f32.mrb[0].mxu0
    %948 = vmatprep.mubr.f32.mxu0 0.0
    %949 = vmatmul.mubr.f32.gmra.mrb[0].mxu0 %v827
    %v950 = vpop.f32.mrb[0].mxu0
    %v951 = vadd.f32 0.0, %v950
    %v952 = vpop.f32.mrb[0].mxu0
    %953 = vmatprep.mubr.f32.mxu0 0.0
    %954 = vmatmul.mubr.f32.gmra.mrb[0].mxu0 %v830
    %v955 = vpop.f32.mrb[0].mxu0
    %v956 = vadd.f32 0.0, %v955
    %v957 = vpop.f32.mrb[0].mxu0
    %958 = vmatprep.mubr.f32.mxu0 0.0
    %959 = vmatmul.mubr.f32.gmra.mrb[0].mxu0 %v833
    %v960 = vpop.f32.mrb[0].mxu0
    %v961 = vadd.f32 0.0, %v960
    %v962 = vpop.f32.mrb[0].mxu0
    %963 = vmatprep.mubr.f32.mxu0 0.0
    %964 = vmatmul.mubr.f32.gmra.mrb[0].mxu0 %v836
    %v965 = vpop.f32.mrb[0].mxu0
    %v966 = vadd.f32 0.0, %v965
    %v967 = vpop.f32.mrb[0].mxu0
    %968 = vmatprep.mubr.f32.mxu0 0.0
    %969 = vmatmul.mubr.f32.gmra.mrb[0].mxu0 %v839
    %v970 = vpop.f32.mrb[0].mxu0
    %v971 = vadd.f32 0.0, %v970
    %v972 = vpop.f32.mrb[0].mxu0
    %973 = vmatprep.mubr.f32.mxu0 0.0
    %974 = vmatmul.mubr.f32.gmra.mrb[0].mxu0 %v842
    %v975 = vpop.f32.mrb[0].mxu0
    %v976 = vadd.f32 0.0, %v975
    %v977 = vpop.f32.mrb[0].mxu0
    %978 = vmatprep.mubr.f32.mxu0 0.0
    %979 = vmatmul.mubr.f32.gmra.mrb[0].mxu0 %v845
    %v980 = vpop.f32.mrb[0].mxu0
    %v981 = vadd.f32 0.0, %v980
    %v982 = vpop.f32.mrb[0].mxu0
    %983 = vmatprep.mubr.f32.mxu0 0.0
    %984 = vmatmul.mubr.f32.gmra.mrb[0].mxu0 %v848
    %v985 = vpop.f32.mrb[0].mxu0
    %v986 = vadd.f32 0.0, %v985
    %v987 = vpop.f32.mrb[0].mxu0
    %988 = vmatprep.mubr.f32.mxu0 0.0
    %989 = vmatmul.mubr.f32.gmra.mrb[0].mxu0 %v851
    %v990 = vpop.f32.mrb[0].mxu0
    %v991 = vadd.f32 0.0, %v990
    %v992 = vpop.f32.mrb[0].mxu0
    %993 = vmatprep.mubr.f32.mxu0 0.0
    %994 = vmatmul.mubr.f32.gmra.mrb[0].mxu0 %v854
    %v995 = vpop.f32.mrb[0].mxu0
    %v996 = vadd.f32 0.0, %v995
    %v997 = vpop.f32.mrb[0].mxu0
    %998 = vmatprep.mubr.f32.mxu0 0.0
    %999 = vmatmul.mubr.f32.gmra.mrb[0].mxu0 %v857
    %v1000 = vpop.f32.mrb[0].mxu0
    %v1001 = vadd.f32 0.0, %v1000
    %v1002 = vpop.f32.mrb[0].mxu0
    %1003 = vdwg.mxu0
    %1020 = vrot.lane.b32.xlu0 %v926, 64
    %v1021 = vpop.permute.xlu0 %1020
    %1022 = vrot.lane.b32.xlu0 %v931, 64
    %v1023 = vpop.permute.xlu0 %1022
    %1024 = vrot.lane.b32.xlu0 %v936, 64
    %v1025 = vpop.permute.xlu0 %1024
    %1026 = vrot.lane.b32.xlu0 %v941, 64
    %v1027 = vpop.permute.xlu0 %1026
    %1028 = vrot.lane.b32.xlu0 %v946, 64
    %v1029 = vpop.permute.xlu0 %1028
    %1030 = vrot.lane.b32.xlu0 %v951, 64
    %v1031 = vpop.permute.xlu0 %1030
    %1032 = vrot.lane.b32.xlu0 %v956, 64
    %v1033 = vpop.permute.xlu0 %1032
    %1034 = vrot.lane.b32.xlu0 %v961, 64
    %v1035 = vpop.permute.xlu0 %1034
    %1036 = vrot.lane.b32.xlu0 %v966, 64
    %v1037 = vpop.permute.xlu0 %1036
    %1038 = vrot.lane.b32.xlu0 %v971, 64
    %v1039 = vpop.permute.xlu0 %1038
    %1040 = vrot.lane.b32.xlu0 %v976, 64
    %v1041 = vpop.permute.xlu0 %1040
    %1042 = vrot.lane.b32.xlu0 %v981, 64
    %v1043 = vpop.permute.xlu0 %1042
    %1044 = vrot.lane.b32.xlu0 %v986, 64
    %v1045 = vpop.permute.xlu0 %1044
    %1046 = vrot.lane.b32.xlu0 %v991, 64
    %v1047 = vpop.permute.xlu0 %1046
    %1048 = vrot.lane.b32.xlu0 %v996, 64
    %v1049 = vpop.permute.xlu0 %1048
    %1050 = vrot.lane.b32.xlu0 %v1001, 64
    %v1051 = vpop.permute.xlu0 %1050
    %vm1068 = vcmask 785920
    %1069 = vst.msk [vmem:[#allocation2] sm:$0xff] %vm1068, %v1021
    %1070 = vst.msk [vmem:[#allocation2 + $0x8] sm:$0xff] %vm1068, %v1023
    %1071 = vst.msk [vmem:[#allocation2 + $0x10] sm:$0xff] %vm1068, %v1025
    %1072 = vst.msk [vmem:[#allocation2 + $0x18] sm:$0xff] %vm1068, %v1027
    %1073 = vst.msk [vmem:[#allocation2 + $0x20] sm:$0xff] %vm1068, %v1029
    %1074 = vst.msk [vmem:[#allocation2 + $0x28] sm:$0xff] %vm1068, %v1031
    %1075 = vst.msk [vmem:[#allocation2 + $0x30] sm:$0xff] %vm1068, %v1033
    %1076 = vst.msk [vmem:[#allocation2 + $0x38] sm:$0xff] %vm1068, %v1035
    %1077 = vst.msk [vmem:[#allocation2 + $0x40] sm:$0xff] %vm1068, %v1037
    %1078 = vst.msk [vmem:[#allocation2 + $0x48] sm:$0xff] %vm1068, %v1039
    %1079 = vst.msk [vmem:[#allocation2 + $0x50] sm:$0xff] %vm1068, %v1041
    %1080 = vst.msk [vmem:[#allocation2 + $0x58] sm:$0xff] %vm1068, %v1043
    %1081 = vst.msk [vmem:[#allocation2 + $0x60] sm:$0xff] %vm1068, %v1045
    %1082 = vst.msk [vmem:[#allocation2 + $0x68] sm:$0xff] %vm1068, %v1047
    %1083 = vst.msk [vmem:[#allocation2 + $0x70] sm:$0xff] %vm1068, %v1049
    %1084 = vst.msk [vmem:[#allocation2 + $0x78] sm:$0xff] %vm1068, %v1051
    %1085 = vset.pattern.permute.xlu0 3
    %1086 = vperm.xlu0 %1085, %v12
    %v1087 = vpop.permute.xlu0 %1086
    %1088 = vset.pattern.permute.xlu0 3
    %1089 = vperm.xlu0 %1088, %v13
    %v1090 = vpop.permute.xlu0 %1089
    %1091 = vset.pattern.permute.xlu0 3
    %1092 = vperm.xlu0 %1091, %v14
    %v1093 = vpop.permute.xlu0 %1092
    %1094 = vset.pattern.permute.xlu0 3
    %1095 = vperm.xlu0 %1094, %v15
    %v1096 = vpop.permute.xlu0 %1095
    %1097 = vset.pattern.permute.xlu0 3
    %1098 = vperm.xlu0 %1097, %v16
    %v1099 = vpop.permute.xlu0 %1098
    %1100 = vset.pattern.permute.xlu0 3
    %1101 = vperm.xlu0 %1100, %v17
    %v1102 = vpop.permute.xlu0 %1101
    %1103 = vset.pattern.permute.xlu0 3
    %1104 = vperm.xlu0 %1103, %v18
    %v1105 = vpop.permute.xlu0 %1104
    %1106 = vset.pattern.permute.xlu0 3
    %1107 = vperm.xlu0 %1106, %v19
    %v1108 = vpop.permute.xlu0 %1107
    %1109 = vset.pattern.permute.xlu0 3
    %1110 = vperm.xlu0 %1109, %v20
    %v1111 = vpop.permute.xlu0 %1110
    %1112 = vset.pattern.permute.xlu0 3
    %1113 = vperm.xlu0 %1112, %v21
    %v1114 = vpop.permute.xlu0 %1113
    %1115 = vset.pattern.permute.xlu0 3
    %1116 = vperm.xlu0 %1115, %v22
    %v1117 = vpop.permute.xlu0 %1116
    %1118 = vset.pattern.permute.xlu0 3
    %1119 = vperm.xlu0 %1118, %v23
    %v1120 = vpop.permute.xlu0 %1119
    %1121 = vset.pattern.permute.xlu0 3
    %1122 = vperm.xlu0 %1121, %v24
    %v1123 = vpop.permute.xlu0 %1122
    %1124 = vset.pattern.permute.xlu0 3
    %1125 = vperm.xlu0 %1124, %v25
    %v1126 = vpop.permute.xlu0 %1125
    %1127 = vset.pattern.permute.xlu0 3
    %1128 = vperm.xlu0 %1127, %v26
    %v1129 = vpop.permute.xlu0 %1128
    %1130 = vset.pattern.permute.xlu0 3
    %1131 = vperm.xlu0 %1130, %v27
    %v1132 = vpop.permute.xlu0 %1131
    %vm1133 = vcmp.eq.s32.totalorder %v1087, %v37
    %vm1134 = vcmp.eq.s32.totalorder %v1090, %v37
    %vm1135 = vcmp.eq.s32.totalorder %v1093, %v37
    %vm1136 = vcmp.eq.s32.totalorder %v1096, %v37
    %vm1137 = vcmp.eq.s32.totalorder %v1099, %v37
    %vm1138 = vcmp.eq.s32.totalorder %v1102, %v37
    %vm1139 = vcmp.eq.s32.totalorder %v1105, %v37
    %vm1140 = vcmp.eq.s32.totalorder %v1108, %v37
    %vm1141 = vcmp.eq.s32.totalorder %v1111, %v37
    %vm1142 = vcmp.eq.s32.totalorder %v1114, %v37
    %vm1143 = vcmp.eq.s32.totalorder %v1117, %v37
    %vm1144 = vcmp.eq.s32.totalorder %v1120, %v37
    %vm1145 = vcmp.eq.s32.totalorder %v1123, %v37
    %vm1146 = vcmp.eq.s32.totalorder %v1126, %v37
    %vm1147 = vcmp.eq.s32.totalorder %v1129, %v37
    %vm1148 = vcmp.eq.s32.totalorder %v1132, %v37
    %v1149 = vsel %vm1133, 1, 0
    %v1150 = vsel %vm1134, 1, 0
    %v1151 = vsel %vm1135, 1, 0
    %v1152 = vsel %vm1136, 1, 0
    %v1153 = vsel %vm1137, 1, 0
    %v1154 = vsel %vm1138, 1, 0
    %v1155 = vsel %vm1139, 1, 0
    %v1156 = vsel %vm1140, 1, 0
    %v1157 = vsel %vm1141, 1, 0
    %v1158 = vsel %vm1142, 1, 0
    %v1159 = vsel %vm1143, 1, 0
    %v1160 = vsel %vm1144, 1, 0
    %v1161 = vsel %vm1145, 1, 0
    %v1162 = vsel %vm1146, 1, 0
    %v1163 = vsel %vm1147, 1, 0
    %v1164 = vsel %vm1148, 1, 0
    %v1165 = vcvt.s32.f32 %v1149
    %v1166 = vcvt.s32.f32 %v1150
    %v1167 = vcvt.s32.f32 %v1151
    %v1168 = vcvt.s32.f32 %v1152
    %v1169 = vcvt.s32.f32 %v1153
    %v1170 = vcvt.s32.f32 %v1154
    %v1171 = vcvt.s32.f32 %v1155
    %v1172 = vcvt.s32.f32 %v1156
    %v1173 = vcvt.s32.f32 %v1157
    %v1174 = vcvt.s32.f32 %v1158
    %v1175 = vcvt.s32.f32 %v1159
    %v1176 = vcvt.s32.f32 %v1160
    %v1177 = vcvt.s32.f32 %v1161
    %v1178 = vcvt.s32.f32 %v1162
    %v1179 = vcvt.s32.f32 %v1163
    %v1180 = vcvt.s32.f32 %v1164
    %v1182 = vsel %vm134, %v1165, 0
    %v1185 = vsel %vm134, %v1166, 0
    %v1188 = vsel %vm134, %v1167, 0
    %v1191 = vsel %vm134, %v1168, 0
    %v1194 = vsel %vm134, %v1169, 0
    %v1197 = vsel %vm134, %v1170, 0
    %v1200 = vsel %vm134, %v1171, 0
    %v1203 = vsel %vm134, %v1172, 0
    %v1206 = vsel %vm134, %v1173, 0
    %v1209 = vsel %vm134, %v1174, 0
    %v1212 = vsel %vm134, %v1175, 0
    %v1215 = vsel %vm134, %v1176, 0
    %v1218 = vsel %vm134, %v1177, 0
    %v1221 = vsel %vm134, %v1178, 0
    %v1224 = vsel %vm134, %v1179, 0
    %v1227 = vsel %vm134, %v1180, 0
    %1229 = vmatprep.subr.mxu0 0.0
    %1230 = vmatpush1.msra.mxu0 %v28
    %1231 = vmatprep.subr.mxu0 0.0
    %1232 = vmatpush1.msra.mxu0 %v29
    %1233 = vmatprep.subr.mxu0 0.0
    %1234 = vmatpush1.msra.mxu0 %v30
    %1235 = vmatprep.subr.mxu0 0.0
    %1236 = vmatpush1.msra.mxu0 %v31
    %1237 = vmatprep.subr.mxu0 0.0
    %1238 = vmatpush1.msra.mxu0 %v32
    %1239 = vmatprep.subr.mxu0 0.0
    %1240 = vmatpush1.msra.mxu0 %v33
    %1241 = vmatprep.subr.mxu0 0.0
    %1242 = vmatpush1.msra.mxu0 %v34
    %1243 = vmatprep.subr.mxu0 0.0
    %1244 = vmatpush1.msra.mxu0 %v35
    %1245 = vmatprep.subr.mxu0 0.0
    %1246 = vmatpush1.msra.mxu0 0.0
    %1247 = vmatprep.subr.mxu0 0.0
    %1248 = vmatpush1.msra.mxu0 0.0
    %1249 = vmatprep.subr.mxu0 0.0
    %1250 = vmatpush1.msra.mxu0 0.0
    %1251 = vmatprep.subr.mxu0 0.0
    %1252 = vmatpush1.msra.mxu0 0.0
    %1253 = vmatprep.subr.mxu0 0.0
    %1254 = vmatpush1.msra.mxu0 0.0
    %1255 = vmatprep.subr.mxu0 0.0
    %1256 = vmatpush1.msra.mxu0 0.0
    %1257 = vmatprep.subr.mxu0 0.0
    %1258 = vmatpush1.msra.mxu0 0.0
    %1259 = vmatprep.subr.mxu0 0.0
    %1260 = vmatpush1.msra.mxu0 0.0
    %1261 = vmatprep.subr.mxu0 0.0
    %1262 = vmatpush1.msra.mxu0 0.0
    %1263 = vmatprep.subr.mxu0 0.0
    %1264 = vmatpush1.msra.mxu0 0.0
    %1265 = vmatprep.subr.mxu0 0.0
    %1266 = vmatpush1.msra.mxu0 0.0
    %1267 = vmatprep.subr.mxu0 0.0
    %1268 = vmatpush1.msra.mxu0 0.0
    %1269 = vmatprep.subr.mxu0 0.0
    %1270 = vmatpush1.msra.mxu0 0.0
    %1271 = vmatprep.subr.mxu0 0.0
    %1272 = vmatpush1.msra.mxu0 0.0
    %1273 = vmatprep.subr.mxu0 0.0
    %1274 = vmatpush1.msra.mxu0 0.0
    %1275 = vmatprep.subr.mxu0 0.0
    %1276 = vmatpush1.msra.mxu0 0.0
    %1277 = vmatprep.subr.mxu0 0.0
    %1278 = vmatpush1.msra.mxu0 0.0
    %1279 = vmatprep.subr.mxu0 0.0
    %1280 = vmatpush1.msra.mxu0 0.0
    %1281 = vmatprep.subr.mxu0 0.0
    %1282 = vmatpush1.msra.mxu0 0.0
    %1283 = vmatprep.subr.mxu0 0.0
    %1284 = vmatpush1.msra.mxu0 0.0
    %1285 = vmatprep.subr.mxu0 0.0
    %1286 = vmatpush1.msra.mxu0 0.0
    %1287 = vmatprep.subr.mxu0 0.0
    %1288 = vmatpush1.msra.mxu0 0.0
    %1289 = vmatprep.subr.mxu0 0.0
    %1290 = vmatpush1.msra.mxu0 0.0
    %1291 = vmatprep.subr.mxu0 0.0
    %1292 = vmatpush1.msra.mxu0 0.0
    %1293 = vmatprep.mubr.f32.mxu0 0.0
    %1294 = vmatmul.mubr.f32.gmra.mrb[0].mxu0 %v1182
    %v1295 = vpop.f32.mrb[0].mxu0
    %v1296 = vadd.f32 0.0, %v1295
    %v1297 = vpop.f32.mrb[0].mxu0
    %1298 = vmatprep.mubr.f32.mxu0 0.0
    %1299 = vmatmul.mubr.f32.gmra.mrb[0].mxu0 %v1185
    %v1300 = vpop.f32.mrb[0].mxu0
    %v1301 = vadd.f32 0.0, %v1300
    %v1302 = vpop.f32.mrb[0].mxu0
    %1303 = vmatprep.mubr.f32.mxu0 0.0
    %1304 = vmatmul.mubr.f32.gmra.mrb[0].mxu0 %v1188
    %v1305 = vpop.f32.mrb[0].mxu0
    %v1306 = vadd.f32 0.0, %v1305
    %v1307 = vpop.f32.mrb[0].mxu0
    %1308 = vmatprep.mubr.f32.mxu0 0.0
    %1309 = vmatmul.mubr.f32.gmra.mrb[0].mxu0 %v1191
    %v1310 = vpop.f32.mrb[0].mxu0
    %v1311 = vadd.f32 0.0, %v1310
    %v1312 = vpop.f32.mrb[0].mxu0
    %1313 = vmatprep.mubr.f32.mxu0 0.0
    %1314 = vmatmul.mubr.f32.gmra.mrb[0].mxu0 %v1194
    %v1315 = vpop.f32.mrb[0].mxu0
    %v1316 = vadd.f32 0.0, %v1315
    %v1317 = vpop.f32.mrb[0].mxu0
    %1318 = vmatprep.mubr.f32.mxu0 0.0
    %1319 = vmatmul.mubr.f32.gmra.mrb[0].mxu0 %v1197
    %v1320 = vpop.f32.mrb[0].mxu0
    %v1321 = vadd.f32 0.0, %v1320
    %v1322 = vpop.f32.mrb[0].mxu0
    %1323 = vmatprep.mubr.f32.mxu0 0.0
    %1324 = vmatmul.mubr.f32.gmra.mrb[0].mxu0 %v1200
    %v1325 = vpop.f32.mrb[0].mxu0
    %v1326 = vadd.f32 0.0, %v1325
    %v1327 = vpop.f32.mrb[0].mxu0
    %1328 = vmatprep.mubr.f32.mxu0 0.0
    %1329 = vmatmul.mubr.f32.gmra.mrb[0].mxu0 %v1203
    %v1330 = vpop.f32.mrb[0].mxu0
    %v1331 = vadd.f32 0.0, %v1330
    %v1332 = vpop.f32.mrb[0].mxu0
    %1333 = vmatprep.mubr.f32.mxu0 0.0
    %1334 = vmatmul.mubr.f32.gmra.mrb[0].mxu0 %v1206
    %v1335 = vpop.f32.mrb[0].mxu0
    %v1336 = vadd.f32 0.0, %v1335
    %v1337 = vpop.f32.mrb[0].mxu0
    %1338 = vmatprep.mubr.f32.mxu0 0.0
    %1339 = vmatmul.mubr.f32.gmra.mrb[0].mxu0 %v1209
    %v1340 = vpop.f32.mrb[0].mxu0
    %v1341 = vadd.f32 0.0, %v1340
    %v1342 = vpop.f32.mrb[0].mxu0
    %1343 = vmatprep.mubr.f32.mxu0 0.0
    %1344 = vmatmul.mubr.f32.gmra.mrb[0].mxu0 %v1212
    %v1345 = vpop.f32.mrb[0].mxu0
    %v1346 = vadd.f32 0.0, %v1345
    %v1347 = vpop.f32.mrb[0].mxu0
    %1348 = vmatprep.mubr.f32.mxu0 0.0
    %1349 = vmatmul.mubr.f32.gmra.mrb[0].mxu0 %v1215
    %v1350 = vpop.f32.mrb[0].mxu0
    %v1351 = vadd.f32 0.0, %v1350
    %v1352 = vpop.f32.mrb[0].mxu0
    %1353 = vmatprep.mubr.f32.mxu0 0.0
    %1354 = vmatmul.mubr.f32.gmra.mrb[0].mxu0 %v1218
    %v1355 = vpop.f32.mrb[0].mxu0
    %v1356 = vadd.f32 0.0, %v1355
    %v1357 = vpop.f32.mrb[0].mxu0
    %1358 = vmatprep.mubr.f32.mxu0 0.0
    %1359 = vmatmul.mubr.f32.gmra.mrb[0].mxu0 %v1221
    %v1360 = vpop.f32.mrb[0].mxu0
    %v1361 = vadd.f32 0.0, %v1360
    %v1362 = vpop.f32.mrb[0].mxu0
    %1363 = vmatprep.mubr.f32.mxu0 0.0
    %1364 = vmatmul.mubr.f32.gmra.mrb[0].mxu0 %v1224
    %v1365 = vpop.f32.mrb[0].mxu0
    %v1366 = vadd.f32 0.0, %v1365
    %v1367 = vpop.f32.mrb[0].mxu0
    %1368 = vmatprep.mubr.f32.mxu0 0.0
    %1369 = vmatmul.mubr.f32.gmra.mrb[0].mxu0 %v1227
    %v1370 = vpop.f32.mrb[0].mxu0
    %v1371 = vadd.f32 0.0, %v1370
    %v1372 = vpop.f32.mrb[0].mxu0
    %1373 = vdwg.mxu0
    %1390 = vrot.lane.b32.xlu0 %v1296, 96
    %v1391 = vpop.permute.xlu0 %1390
    %1392 = vrot.lane.b32.xlu0 %v1301, 96
    %v1393 = vpop.permute.xlu0 %1392
    %1394 = vrot.lane.b32.xlu0 %v1306, 96
    %v1395 = vpop.permute.xlu0 %1394
    %1396 = vrot.lane.b32.xlu0 %v1311, 96
    %v1397 = vpop.permute.xlu0 %1396
    %1398 = vrot.lane.b32.xlu0 %v1316, 96
    %v1399 = vpop.permute.xlu0 %1398
    %1400 = vrot.lane.b32.xlu0 %v1321, 96
    %v1401 = vpop.permute.xlu0 %1400
    %1402 = vrot.lane.b32.xlu0 %v1326, 96
    %v1403 = vpop.permute.xlu0 %1402
    %1404 = vrot.lane.b32.xlu0 %v1331, 96
    %v1405 = vpop.permute.xlu0 %1404
    %1406 = vrot.lane.b32.xlu0 %v1336, 96
    %v1407 = vpop.permute.xlu0 %1406
    %1408 = vrot.lane.b32.xlu0 %v1341, 96
    %v1409 = vpop.permute.xlu0 %1408
    %1410 = vrot.lane.b32.xlu0 %v1346, 96
    %v1411 = vpop.permute.xlu0 %1410
    %1412 = vrot.lane.b32.xlu0 %v1351, 96
    %v1413 = vpop.permute.xlu0 %1412
    %1414 = vrot.lane.b32.xlu0 %v1356, 96
    %v1415 = vpop.permute.xlu0 %1414
    %1416 = vrot.lane.b32.xlu0 %v1361, 96
    %v1417 = vpop.permute.xlu0 %1416
    %1418 = vrot.lane.b32.xlu0 %v1366, 96
    %v1419 = vpop.permute.xlu0 %1418
    %1420 = vrot.lane.b32.xlu0 %v1371, 96
    %v1421 = vpop.permute.xlu0 %1420
    %vm1438 = vcmask 1048320
    %1439 = vst.msk [vmem:[#allocation2] sm:$0xff] %vm1438, %v1391
    %1440 = vst.msk [vmem:[#allocation2 + $0x8] sm:$0xff] %vm1438, %v1393
    %1441 = vst.msk [vmem:[#allocation2 + $0x10] sm:$0xff] %vm1438, %v1395
    %1442 = vst.msk [vmem:[#allocation2 + $0x18] sm:$0xff] %vm1438, %v1397
    %1443 = vst.msk [vmem:[#allocation2 + $0x20] sm:$0xff] %vm1438, %v1399
    %1444 = vst.msk [vmem:[#allocation2 + $0x28] sm:$0xff] %vm1438, %v1401
    %1445 = vst.msk [vmem:[#allocation2 + $0x30] sm:$0xff] %vm1438, %v1403
    %1446 = vst.msk [vmem:[#allocation2 + $0x38] sm:$0xff] %vm1438, %v1405
    %1447 = vst.msk [vmem:[#allocation2 + $0x40] sm:$0xff] %vm1438, %v1407
    %1448 = vst.msk [vmem:[#allocation2 + $0x48] sm:$0xff] %vm1438, %v1409
    %1449 = vst.msk [vmem:[#allocation2 + $0x50] sm:$0xff] %vm1438, %v1411
    %1450 = vst.msk [vmem:[#allocation2 + $0x58] sm:$0xff] %vm1438, %v1413
    %1451 = vst.msk [vmem:[#allocation2 + $0x60] sm:$0xff] %vm1438, %v1415
    %1452 = vst.msk [vmem:[#allocation2 + $0x68] sm:$0xff] %vm1438, %v1417
    %1453 = vst.msk [vmem:[#allocation2 + $0x70] sm:$0xff] %vm1438, %v1419
    %1454 = vst.msk [vmem:[#allocation2 + $0x78] sm:$0xff] %vm1438, %v1421
    // Predicated region
    $region10: #{tpu_custom_call.1} parent=1 // pred_check
      _
    $region11: #{tpu_custom_call.1} parent=1 // pred_check_branch
      %1456 = sbr.rel (0) target = $region13
    $region12: #{tpu_custom_call.1} parent=1 // pred_region
      %s1458 = ssub.s32 2048, 2048
      %1459 = vsyncadd [#allocation3], %s1458
      %s1460 = sshll.u32 [#allocation2], 4
      %s1461 = int_to_ptr.vmem [resolvable:$true] %s1460
      %1466 = dma.vmem_to_hbm [thread:$0]  %s1461, 2048, %s2, [#allocation3], 128, 128, 8
    $region13: #{tpu_custom_call.1} parent=1 // pred_fallthru
      _
    // Predicated region
    $region14: #{tpu_custom_call.1} parent=1 // pred_check
      _
    $region15: #{tpu_custom_call.1} parent=1 // pred_check_branch
      %1468 = sbr.rel (0) target = $region17
    $region16: #{tpu_custom_call.1} parent=1 // pred_region
      %1469 = dma.done [#allocation3], 2048
    $region17: #{tpu_custom_call.1} parent=1 // pred_fallthru
      _
    %1470 = vsyncpa [#allocation3], 1

</llo_original>
